<compile_context>
chip_gen: v6e
topology: v6e:2x2x1
jax: 0.10.0
libtpu: 0.0.40
codegen_flags: <defaults>
</compile_context>

<pallas_src>
import jax
import jax.numpy as jnp
from jax.experimental import pallas as pl
from jax.experimental.pallas import tpu as pltpu


def _copy_kernel(x_ref, o_ref):
    # Hot path: straight VMEM tile copy (load + store). DMA-bound either side.
    o_ref[...] = x_ref[...]


_LANE = 128
_SUBLANE = 32                           # safe sublane multiple for f32/bf16/int8
_GRIDLESS_BYTES = 4 * 1024 * 1024       # whole-array single block below this
_TARGET_TILE_BYTES = 2 * 1024 * 1024    # per-block bytes for the tiled paths
_MAX_COLS = 4096                        # widest lane-dense column count we try
_MAX_BLOCK_VMEM = 8 * 1024 * 1024       # hard cap on one block's VMEM footprint


def _pick_cols(total: int):
    """Largest lane-dense (128-multiple) divisor of `total`, capped at _MAX_COLS."""
    if total % _LANE != 0:
        return None
    t = total // _LANE
    for d in range(min(_MAX_COLS // _LANE, t), 0, -1):
        if t % d == 0:
            return d * _LANE
    return _LANE


def _cost(nbytes: int):
    # Pure copy: read + write, no flops. Hint for XLA's scheduler.
    return pl.CostEstimate(flops=0, transcendentals=0, bytes_accessed=2 * nbytes)


def _round_rows(tile_r: int, rows: int) -> int:
    """Round a row-tile down to a sublane multiple (>=32) and clamp to full rows."""
    tile_r = max(_SUBLANE, (tile_r // _SUBLANE) * _SUBLANE)
    return min(tile_r, rows)


def copy_tensor(x: jnp.ndarray,
                *,
                gridless_max_bytes: int = _GRIDLESS_BYTES,
                target_tile_bytes: int = _TARGET_TILE_BYTES):
    """Pallas implementation of CopyTensor.forward: returns [copy(x)]."""
    orig_shape = x.shape
    dtype = x.dtype
    total = int(x.size)
    itemsize = jnp.dtype(dtype).itemsize
    nbytes = total * itemsize

    if total == 0:
        # Degenerate empty tensor: nothing to copy.
        return [jnp.zeros(orig_shape, dtype)]

    cols = _pick_cols(total)

    # ---------- small tensors: single gridless whole-array block ----------
    if nbytes <= gridless_max_bytes:
        if cols is not None:
            view = x.reshape(total // cols, cols)   # free: contiguous reshape
        elif x.ndim >= 2:
            view = x                                # whole-array block, any shape
        else:
            view = x.reshape(1, total)              # scalars / odd 1-D sizes
        out = pl.pallas_call(
            _copy_kernel,
            out_shape=jax.ShapeDtypeStruct(view.shape, dtype),
            in_specs=[pl.BlockSpec(memory_space=pltpu.MemorySpace.VMEM)],
            out_specs=pl.BlockSpec(memory_space=pltpu.MemorySpace.VMEM),
            cost_estimate=_cost(nbytes),
        )(view)
        return [out.reshape(orig_shape)]

    # ---------- large & 128-divisible: lane-dense 2D tiling (pad-free) ----------
    if cols is not None:
        rows = total // cols
        view = x.reshape(rows, cols)                # free: contiguous reshape
        row_bytes = cols * itemsize
        tile_r = _round_rows(max(1, target_tile_bytes // row_bytes), rows)
        out2d = pl.pallas_call(
            _copy_kernel,
            out_shape=jax.ShapeDtypeStruct(view.shape, dtype),
            grid_spec=pltpu.PrefetchScalarGridSpec(
                num_scalar_prefetch=0,
                grid=(pl.cdiv(rows, tile_r),),
                in_specs=[pl.BlockSpec((tile_r, cols), lambda i: (i, 0))],
                out_specs=pl.BlockSpec((tile_r, cols), lambda i: (i, 0)),
            ),
            compiler_params=pltpu.CompilerParams(
                dimension_semantics=("parallel",)),
            cost_estimate=_cost(nbytes),
        )(view)
        return [out2d.reshape(orig_shape)]

    # ---------- large & not 128-divisible: collapse leading dims, tile rows ----------
    # Block = (tile_r, last_dim) with the full last dim, so no padding and no
    # extra HBM traffic; the last grid block may be partial (Pallas masks it).
    if x.ndim >= 2:
        last = x.shape[-1]
        rows = total // last
        padded_last = ((last + _LANE - 1) // _LANE) * _LANE   # VMEM lane padding
        padded_row_bytes = padded_last * itemsize
        tile_r = _round_rows(max(1, target_tile_bytes // padded_row_bytes), rows)
        if rows >= 2 and tile_r * padded_row_bytes <= _MAX_BLOCK_VMEM:
            view = x.reshape(rows, last)            # free: contiguous reshape
            out2d = pl.pallas_call(
                _copy_kernel,
                out_shape=jax.ShapeDtypeStruct(view.shape, dtype),
                grid_spec=pltpu.PrefetchScalarGridSpec(
                    num_scalar_prefetch=0,
                    grid=(pl.cdiv(rows, tile_r),),
                    in_specs=[pl.BlockSpec((tile_r, last), lambda i: (i, 0))],
                    out_specs=pl.BlockSpec((tile_r, last), lambda i: (i, 0)),
                ),
                compiler_params=pltpu.CompilerParams(
                    dimension_semantics=("parallel",)),
                cost_estimate=_cost(nbytes),
            )(view)
            return [out2d.reshape(orig_shape)]

    # ---------- rare fallback: pad to a lane multiple, copy, slice back ----------
    # TODO(synk): only reachable for huge 1-D non-128-divisible tensors (or a
    # single enormous trailing dim); a bulk+tail split would avoid the extra
    # pad/slice HBM round trips.
    pad = (-total) % _LANE
    flat = jnp.pad(x.reshape(-1), (0, pad))
    cols_f = _LANE
    rows_f = flat.size // cols_f
    viewf = flat.reshape(rows_f, cols_f)
    tile_r = _round_rows(max(1, target_tile_bytes // (cols_f * itemsize)), rows_f)
    out2d = pl.pallas_call(
        _copy_kernel,
        out_shape=jax.ShapeDtypeStruct(viewf.shape, dtype),
        grid_spec=pltpu.PrefetchScalarGridSpec(
            num_scalar_prefetch=0,
            grid=(pl.cdiv(rows_f, tile_r),),
            in_specs=[pl.BlockSpec((tile_r, cols_f), lambda i: (i, 0))],
            out_specs=pl.BlockSpec((tile_r, cols_f), lambda i: (i, 0)),
        ),
        compiler_params=pltpu.CompilerParams(dimension_semantics=("parallel",)),
        cost_estimate=_cost(nbytes),
    )(viewf)
    out = out2d.reshape(-1)[:total].reshape(orig_shape)
    return [out]


if __name__ == "__main__":
    key = jax.random.PRNGKey(0)
    k1, k2, k3, k4 = jax.random.split(key, 4)

    # 1) Small NCHW input consistent with the detection app (gridless path).
    x_small = jax.random.normal(k1, (2, 4, 16, 16), dtype=jnp.float32)
    out_small = jax.block_until_ready(copy_tensor(x_small)[0])
    assert out_small.shape == x_small.shape and out_small.dtype == x_small.dtype
    assert bool(jnp.array_equal(out_small, x_small))

    # 2) Tiled, lane-dense path (thresholds overridden so a small tensor
    #    exercises the multi-step grid: 64 rows x 4096 cols -> 2 grid steps).
    x_mid = jax.random.normal(k2, (8, 32, 32, 32), dtype=jnp.float32)
    out_mid = jax.block_until_ready(
        copy_tensor(x_mid, gridless_max_bytes=0, target_tile_bytes=64 * 1024)[0])
    assert out_mid.shape == x_mid.shape and bool(jnp.array_equal(out_mid, x_mid))

    # 3) Non-128-divisible element count on the tiled leading-dim path
    #    (240 collapsed rows of 7, 32-row blocks, partial tail block).
    x_odd_big = jax.random.normal(k3, (16, 3, 5, 7), dtype=jnp.float32)
    out_odd_big = jax.block_until_ready(
        copy_tensor(x_odd_big, gridless_max_bytes=0, target_tile_bytes=8 * 1024)[0])
    assert out_odd_big.shape == x_odd_big.shape
    assert bool(jnp.array_equal(out_odd_big, x_odd_big))

    # 4) Awkward small shapes on the gridless whole-array path.
    x_odd = jax.random.normal(k4, (3, 5, 7), dtype=jnp.float32)
    out_odd = jax.block_until_ready(copy_tensor(x_odd)[0])
    assert out_odd.shape == x_odd.shape and bool(jnp.array_equal(out_odd, x_odd))

    x_vec = jnp.arange(37, dtype=jnp.int32)
    out_vec = jax.block_until_ready(copy_tensor(x_vec)[0])
    assert out_vec.shape == x_vec.shape and bool(jnp.array_equal(out_vec, x_vec))

    # 5) bf16 dtype, aligned gridless path.
    x_bf16 = jax.random.normal(k1, (2, 8, 16, 16), dtype=jnp.bfloat16)
    out_bf16 = jax.block_until_ready(copy_tensor(x_bf16)[0])
    assert out_bf16.dtype == jnp.bfloat16 and bool(jnp.array_equal(out_bf16, x_bf16))

    print("KERNEL_OK")
</pallas_src>

<mosaic_0001>
module attributes {stable_mosaic.version = 11 : i64} {
  func.func @_copy_kernel(%arg0: memref<1x2048xf32, #tpu.memory_space<vmem>>, %arg1: memref<1x2048xf32, #tpu.memory_space<vmem>>) attributes {dimension_semantics = [], scalar_prefetch = 0 : i64, scratch_operands = 0 : i64, tpu.core_type = #tpu.core_type<tc>} {
    %c0 = arith.constant 0 : index
    %c0_0 = arith.constant 0 : index
    %0 = vector.load %arg0[%c0, %c0_0] : memref<1x2048xf32, #tpu.memory_space<vmem>>, vector<1x2048xf32>
    %c0_1 = arith.constant 0 : index
    %c0_2 = arith.constant 0 : index
    %1 = vector.load %arg1[%c0_1, %c0_2] : memref<1x2048xf32, #tpu.memory_space<vmem>>, vector<1x2048xf32>
    tpu.vector_store %arg1[%c0_1, %c0_2], %0 {strides = array<i32>} : memref<1x2048xf32, #tpu.memory_space<vmem>>, vector<1x2048xf32>,
    return
  }
}

</mosaic_0001>

<llo_original>
// kernel: tpu_custom_call.1
$region0: #{tpu_custom_call.1}
  #allocation0 [shape = 'u32[]', space=smem, size = 0x4, offset = 0x4, fixed_abs, tag = 'smem constant byte address 0x4 - core index']
  #allocation1 [shape = 'u32[144,128]{1,0:T(1,128)}', space=vmem, size = 0x12000, scoped, tag = 'internal scratch']
  %s0 = inlined_call_operand.hbm [shape: f32[1,2048], index: 0, kind: input, shape index: {}]
  %s1 = inlined_call_operand.hbm [shape: f32[1,2048], index: 1, kind: output, shape index: {}]
  %s2 = sld [smem:[#allocation0]]
  $region18: #{tpu_custom_call.1} parent=0
    _
  %s4 = ssub.s32 1, %s2
  %s5 = scalar_select 0, %s4, %s2
  $region1: #{tpu_custom_call.1} parent=0
    #allocation2 [shape = 'u8[8192]{0}', space=vmem, size = 0x2000, scoped, tag = 'input window, operand 0, single buffered']
    #allocation3 [shape = 's32[1]{0}', space=sflag, size = 0x4, scoped, tag = 'scoped memory for tpu_custom_call.1']
    #allocation4 [shape = 's32[1]{0}', space=sflag, size = 0x4, scoped, tag = 'scoped memory for tpu_custom_call.1']
    #allocation5 [shape = 'u8[8192]{0}', space=vmem, size = 0x2000, scoped, tag = 'output window, operand 0, single buffered']
    %6 = vsyncpa [#allocation3], 0
    %7 = vsyncpa [#allocation4], 0
    // Predicated region
    $region2: #{tpu_custom_call.1} parent=1 // pred_check
      _
    $region3: #{tpu_custom_call.1} parent=1 // pred_check_branch
      %9 = sbr.rel (0) target = $region5
    $region4: #{tpu_custom_call.1} parent=1 // pred_region
      %s11 = ssub.s32 256, 256
      %12 = vsyncadd [#allocation3], %s11
      %s14 = sshll.u32 [#allocation2], 4
      %s15 = int_to_ptr.vmem [resolvable:$true] %s14
      %17 = dma.hbm_to_vmem [thread:$0]  %s0, 256, %s15, [#allocation3]
    $region5: #{tpu_custom_call.1} parent=1 // pred_fallthru
      _
    // Predicated region
    $region6: #{tpu_custom_call.1} parent=1 // pred_check
      _
    $region7: #{tpu_custom_call.1} parent=1 // pred_check_branch
      %19 = sbr.rel (0) target = $region9
    $region8: #{tpu_custom_call.1} parent=1 // pred_region
      %20 = dma.done [#allocation3], 256
    $region9: #{tpu_custom_call.1} parent=1 // pred_fallthru
      _
    %v21 = vld [vmem:[#allocation2] sm:$0xff]
    %v22 = vld [vmem:[#allocation2 + $0x8] sm:$0xff]
    %23 = vst [vmem:[#allocation5] sm:$0xff] %v21
    %24 = vst [vmem:[#allocation5 + $0x8] sm:$0xff] %v22
    // Predicated region
    $region10: #{tpu_custom_call.1} parent=1 // pred_check
      _
    $region11: #{tpu_custom_call.1} parent=1 // pred_check_branch
      %26 = sbr.rel (0) target = $region13
    $region12: #{tpu_custom_call.1} parent=1 // pred_region
      %s28 = ssub.s32 256, 256
      %29 = vsyncadd [#allocation4], %s28
      %s31 = sshll.u32 [#allocation5], 4
      %s32 = int_to_ptr.vmem [resolvable:$true] %s31
      %34 = dma.vmem_to_hbm [thread:$0]  %s32, 256, %s1, [#allocation4]
    $region13: #{tpu_custom_call.1} parent=1 // pred_fallthru
      _
    // Predicated region
    $region14: #{tpu_custom_call.1} parent=1 // pred_check
      _
    $region15: #{tpu_custom_call.1} parent=1 // pred_check_branch
      %36 = sbr.rel (0) target = $region17
    $region16: #{tpu_custom_call.1} parent=1 // pred_region
      %37 = dma.done [#allocation4], 256
    $region17: #{tpu_custom_call.1} parent=1 // pred_fallthru
      _
    %38 = vsyncpa [#allocation3], 1
    %39 = vsyncpa [#allocation4], 1

</llo_original>
